<compile_context>
chip_gen: v7x
topology: tpu7x:2x2x1
jax: 0.10.0
libtpu: 0.0.40
codegen_flags: <defaults>
</compile_context>

<pallas_src>
import functools
import math

import jax
import jax.numpy as jnp
from jax.experimental import pallas as pl
from jax.experimental.pallas import tpu as pltpu


def _round_up(x, m):
    return ((x + m - 1) // m) * m


def _linear_out_kernel(x_ref, w_ref, b_ref, o_ref):
    # x_ref: (TM, Dp) f32 VMEM tile of lane-packed rows.
    # w_ref: (Dp, P)  VMEM block-diagonal weight (resident across grid steps),
    #        already stored in the MXU operand dtype (f32 or bf16).
    # b_ref: (1,) SMEM bias scalar.
    # o_ref: (TM, P) f32 VMEM output tile.
    x = x_ref[...].astype(w_ref.dtype)          # cheap VPU cast (no-op for f32)
    y = jnp.dot(x, w_ref[...], preferred_element_type=jnp.float32)
    o_ref[...] = (y + b_ref[0]).astype(o_ref.dtype)


@functools.partial(jax.jit, static_argnames=("block_rows", "mxu_dtype"))
def nn_original_gravity_forward(vX, weight, bias, *, block_rows=16384,
                                mxu_dtype=jnp.float32):
    """vX: (..., dim_input); weight: (1, dim_input); bias: (1,).

    Returns (..., 1) float32, matching torch.nn.Linear(dim_input, 1)(vX).
    Set mxu_dtype=jnp.bfloat16 for the fast MXU-operand path (f32 accumulate).
    """
    *lead, D = vX.shape
    M = int(math.prod(lead)) if lead else 1

    x2d = vX.reshape(M, D).astype(jnp.float32)
    w = weight.reshape(D).astype(jnp.float32)
    b = bias.reshape(1).astype(jnp.float32)

    # ---- Lane packing: fold P consecutive rows into one (P*D)-lane row. ----
    # P is the largest factor with P*D <= 128 that also divides M, so the
    # (M, D) -> (M // P, P*D) reshape is exact and copy-free (no jnp.pad, no
    # ragged packed rows -> no NaN*0 contamination hazard).
    P = 1
    if D <= 128:
        for p in range(128 // D, 0, -1):
            if p >= 1 and M % p == 0:
                P = p
                break
    Dp = P * D
    Mp = M // P

    if P > 1:
        # Block-diagonal (Dp, P): column k holds w in rows [k*D, (k+1)*D).
        w_packed = (jnp.eye(P, dtype=jnp.float32)[:, None, :]
                    * w[None, :, None]).reshape(Dp, P)
    else:
        w_packed = w.reshape(D, 1)
    w_packed = w_packed.astype(mxu_dtype)

    x_packed = x2d.reshape(Mp, Dp)              # contiguous reshape: free in HBM

    # ---- Row tiling (in packed rows). No padding: the final block may be ----
    # partial; Pallas discards out-of-bounds writes and rows are independent.
    # Cap TM so there are >= 2 grid steps whenever possible (both v7x
    # TensorCores pull HBM traffic).
    TM = max(8, min(_round_up(block_rows, 8), _round_up(pl.cdiv(Mp, 2), 8)))
    grid_m = pl.cdiv(Mp, TM)

    w_item = jnp.dtype(mxu_dtype).itemsize
    vmem_bytes = (2 * TM * Dp * 4              # double-buffered X tiles
                  + 2 * TM * P * 4             # double-buffered output tiles
                  + 2 * Dp * P * w_item        # resident weight
                  + (4 << 20))                 # headroom for internal scratch
    vmem_limit = int(max(vmem_bytes, 16 << 20))

    cost = pl.CostEstimate(
        flops=2 * M * D,
        transcendentals=0,
        bytes_accessed=M * D * 4 + M * 4 + Dp * P * w_item + 4,
    )

    out_packed = pl.pallas_call(
        _linear_out_kernel,
        out_shape=jax.ShapeDtypeStruct((Mp, P), jnp.float32),
        grid=(grid_m,),
        in_specs=[
            pl.BlockSpec((TM, Dp), lambda i: (i, 0)),            # X tile
            pl.BlockSpec((Dp, P), lambda i: (0, 0)),             # weight (resident)
            pl.BlockSpec(memory_space=pltpu.MemorySpace.SMEM),   # bias scalar
        ],
        out_specs=pl.BlockSpec((TM, P), lambda i: (i, 0)),
        compiler_params=pltpu.CompilerParams(
            dimension_semantics=("parallel",),                   # megacore on v7x
            vmem_limit_bytes=vmem_limit,
        ),
        cost_estimate=cost,
    )(x_packed, w_packed, b)

    # Unpack: packed row r, column k is original row r*P + k (row-major).
    out = out_packed.reshape(M, 1)
    return out.reshape(*lead, 1)


if __name__ == "__main__":
    master_key = jax.random.PRNGKey(0)

    def run_case(case_key, lead_shape, dim_input, *, mxu_dtype=jnp.float32,
                 block_rows=16384, atol=1e-4, rtol=1e-4):
        k1, k2, k3 = jax.random.split(case_key, 3)
        vX = jax.random.normal(k1, (*lead_shape, dim_input), dtype=jnp.float32)
        weight = jax.random.normal(k2, (1, dim_input), dtype=jnp.float32) * 0.1
        bias = jax.random.normal(k3, (1,), dtype=jnp.float32) * 0.1
        out = jax.block_until_ready(
            nn_original_gravity_forward(vX, weight, bias,
                                        block_rows=block_rows,
                                        mxu_dtype=mxu_dtype))
        ref = vX @ weight.T + bias
        assert out.shape == (*lead_shape, 1), out.shape
        err = float(jnp.max(jnp.abs(out - ref)))
        assert jnp.allclose(out, ref, atol=atol, rtol=rtol), err

    keys = jax.random.split(master_key, 5)

    # 1) Typical get_X_T shape (num_origins, num_dests, dim_input); packed
    #    path (P=4), two grid steps, partial final block, no padding anywhere.
    run_case(keys[0], (4, 600), 32)

    # 2) Small shape; single partial block over a 4-packed-row array.
    run_case(keys[1], (2, 8), 32)

    # 3) dim_input that does not divide 128 -> generalized packing (P=2, Dp=96).
    run_case(keys[2], (3, 40), 48)

    # 4) Row count with no usable packing factor -> unpacked fallback (P=1).
    run_case(keys[3], (1, 35), 32)

    # 5) bf16 MXU-operand fast path (f32 accumulation), looser tolerance.
    run_case(keys[4], (8, 512), 32, mxu_dtype=jnp.bfloat16, atol=5e-2, rtol=0.0)

    print("KERNEL_OK")
</pallas_src>

<mosaic_0001>
module attributes {stable_mosaic.version = 11 : i64} {
  func.func @_linear_out_kernel(%arg0: i32, %arg1: memref<304x128xf32, #tpu.memory_space<vmem>>, %arg2: memref<128x4xf32, #tpu.memory_space<vmem>>, %arg3: memref<1xf32, #tpu.memory_space<smem>>, %arg4: memref<304x4xf32, #tpu.memory_space<vmem>>) attributes {dimension_semantics = [#tpu.dimension_semantics<parallel>], iteration_bounds = array<i64: 2>, scalar_prefetch = 0 : i64, scratch_operands = 0 : i64, tpu.core_type = #tpu.core_type<tc>, window_params = [{transform_indices = @transform_0, window_bounds = array<i64: 304, 128>}, {pipeline_mode = #tpu.pipeline_mode<synchronous>, transform_indices = @transform_1, window_bounds = array<i64: 128, 4>}, {transform_indices = @transform_2, window_bounds = array<i64: 1>}, {transform_indices = @transform_3, window_bounds = array<i64: 304, 4>}]} {
    %c0 = arith.constant 0 : index
    %c0_0 = arith.constant 0 : index
    %0 = vector.load %arg1[%c0, %c0_0] : memref<304x128xf32, #tpu.memory_space<vmem>>, vector<304x128xf32>
    %c0_1 = arith.constant 0 : index
    %c0_2 = arith.constant 0 : index
    %1 = vector.load %arg2[%c0_1, %c0_2] : memref<128x4xf32, #tpu.memory_space<vmem>>, vector<128x4xf32>
    %cst = arith.constant dense<0.000000e+00> : vector<304x4xf32>
    %2 = tpu.matmul %0, %1, %cst {dimension_numbers = #tpu.dot_dimension_numbers<[1], [0], [0], [1], [0, 0, 1, 1], [], []>} : vector<304x128xf32>, vector<128x4xf32>, vector<304x4xf32> -> vector<304x4xf32>
    %c0_3 = arith.constant 0 : index
    %3 = memref.load %arg3[%c0_3] : memref<1xf32, #tpu.memory_space<smem>>
    %4 = vector.broadcast %3 : f32 to vector<304x4xf32>
    %5 = arith.addf %2, %4 : vector<304x4xf32>
    %c0_4 = arith.constant 0 : index
    %c0_5 = arith.constant 0 : index
    %6 = vector.load %arg4[%c0_4, %c0_5] : memref<304x4xf32, #tpu.memory_space<vmem>>, vector<304x4xf32>
    tpu.vector_store %arg4[%c0_4, %c0_5], %5 {strides = array<i32>} : memref<304x4xf32, #tpu.memory_space<vmem>>, vector<304x4xf32>,
    return
  }
  func.func @transform_0(%arg0: i32) -> (i32, i32) {
    %c0_i32 = arith.constant 0 : i32
    %c0_i32_0 = arith.constant 0 : i32
    return %arg0, %c0_i32 : i32, i32
  }
  func.func @transform_1(%arg0: i32) -> (i32, i32) {
    %c0_i32 = arith.constant 0 : i32
    %c0_i32_0 = arith.constant 0 : i32
    %c0_i32_1 = arith.constant 0 : i32
    return %c0_i32, %c0_i32_0 : i32, i32
  }
  func.func @transform_2(%arg0: i32) -> i32 {
    %c0_i32 = arith.constant 0 : i32
    %c0_i32_0 = arith.constant 0 : i32
    return %c0_i32 : i32
  }
  func.func @transform_3(%arg0: i32) -> (i32, i32) {
    %c0_i32 = arith.constant 0 : i32
    %c0_i32_0 = arith.constant 0 : i32
    return %arg0, %c0_i32 : i32, i32
  }
}

</mosaic_0001>

<llo_original>
// kernel: nn_original_gravity_forward.1
$region0: #{nn_original_gravity_forward.1}
  #allocation0 [shape = 'u32[]', space=smem, size = 0x4, offset = 0x4, fixed_abs, tag = 'smem constant byte address 0x4 - core index']
  #allocation1 [shape = 'u32[144,128]{1,0:T(1,128)}', space=vmem, size = 0x12000, scoped, tag = 'internal scratch']
  #allocation2 [shape = 'f32[1]{0:T(128)S(6)}', space=smem, size = 0x200, scoped, tag = 'scoped memory for nn_original_gravity_forward.1']
  %s0 = inlined_call_operand.vmem [shape: f32[600,128], index: 0, kind: input, shape index: {}]
  %s1 = inlined_call_operand.vmem [shape: f32[128,4], index: 1, kind: input, shape index: {}]
  %s2 = inlined_call_operand.<no memory space> [shape: f32[1], index: 2, kind: input, shape index: {}]
  %s3 = inlined_call_operand.vmem [shape: f32[600,4], index: 3, kind: output, shape index: {}]
  %s4 = sld [smem:[#allocation0]]
  $region93: #{nn_original_gravity_forward.1} parent=0
    _
  %s6 = ssub.s32 1, %s4
  %s7 = scalar_select 0, %s6, %s4
  %8 = sst [smem:[#allocation2]] %s2
  $region1: #{nn_original_gravity_forward.1} parent=0
    #allocation3 [shape = 'u8[311296]{0}', space=vmem, size = 0x4c000, scoped, tag = 'output window, operand 0']
    loop: start=0, step=1, limit=4
    $region2: #{nn_original_gravity_forward.1} parent=1 // loop_pre_header
      _
    $region3: #{nn_original_gravity_forward.1} parent=1 // loop_header
      %s10 = sphi 0, %s14
      %p11 = scmp.ge.s32.totalorder %s10, 4
      %s20 = sphi 0, %s22
      %s23 = sphi 0, %s20
      %s24 = sphi 0, %s23
      %s40 = sphi 0, %s24
      %s44 = sphi 0, %s44
      %s46 = sphi 0, %s44
      %s47 = sphi 0, %s46
      %s61 = sphi 0, %s47
      %s65 = sphi 0, %s65
      %s67 = sphi 0, %s65
      %s68 = sphi 0, %s67
      %s82 = sphi 0, %s68
      %s88 = sphi 0, %s90
      %s91 = sphi 0, %s88
      %s92 = sphi 0, %s91
      %s108 = sphi 0, %s92
    $region4: #{nn_original_gravity_forward.1} parent=1 // loop_header_branch
      %13 = sbr.rel (%p11) target = $region8
    $region5: #{nn_original_gravity_forward.1} parent=1 // loop_body
      %s15 = ssub.s32 %s10, 1
      %s16 = ssub.s32 %s10, 2
      %s17 = sadd.s32 %s10, 1
      %s18 = ssub.s32 %s10, %s17
      %p19 = scmp.eq.s32.totalorder %s18, 0
      %s21 = sadd.s32 %s20, 1
      %s22 = scalar_select %p19, %s20, %s21
      %p25 = pneg %p19
      %p26 = scmp.eq.s32.totalorder %s10, 1
      %p27 = por %p25, %p26
      %p28 = scmp.ne.s32.totalorder %s20, %s23
      %p29 = scmp.eq.s32.totalorder %s10, 0
      %p30 = por %p28, %p29
      %p31 = scmp.ne.s32.totalorder %s20, %s23
      %p32 = scmp.eq.s32.totalorder %s15, 1
      %p33 = por %p31, %p32
      %p34 = scmp.ne.s32.totalorder %s23, %s24
      %p35 = scmp.eq.s32.totalorder %s15, 0
      %p36 = por %p34, %p35
      %p37 = scmp.ne.s32.totalorder %s23, %s24
      %p38 = scmp.eq.s32.totalorder %s16, 1
      %p39 = por %p37, %p38
      %p41 = scmp.ne.s32.totalorder %s24, %s40
      %p42 = scmp.eq.s32.totalorder %s16, 0
      %p43 = por %p41, %p42
      %s45 = sadd.s32 %s44, 1
      %p48 = scmp.eq.s32.totalorder %s10, 1
      %p49 = scmp.ne.s32.totalorder %s44, %s46
      %p50 = scmp.eq.s32.totalorder %s10, 0
      %p51 = por %p49, %p50
      %p52 = scmp.ne.s32.totalorder %s44, %s46
      %p53 = scmp.eq.s32.totalorder %s15, 1
      %p54 = por %p52, %p53
      %p55 = scmp.ne.s32.totalorder %s46, %s47
      %p56 = scmp.eq.s32.totalorder %s15, 0
      %p57 = por %p55, %p56
      %p58 = scmp.ne.s32.totalorder %s46, %s47
      %p59 = scmp.eq.s32.totalorder %s16, 1
      %p60 = por %p58, %p59
      %p62 = scmp.ne.s32.totalorder %s47, %s61
      %p63 = scmp.eq.s32.totalorder %s16, 0
      %p64 = por %p62, %p63
      %s66 = sadd.s32 %s65, 1
      %p69 = scmp.eq.s32.totalorder %s10, 1
      %p70 = scmp.ne.s32.totalorder %s65, %s67
      %p71 = scmp.eq.s32.totalorder %s10, 0
      %p72 = por %p70, %p71
      %p73 = scmp.ne.s32.totalorder %s65, %s67
      %p74 = scmp.eq.s32.totalorder %s15, 1
      %p75 = por %p73, %p74
      %p76 = scmp.ne.s32.totalorder %s67, %s68
      %p77 = scmp.eq.s32.totalorder %s15, 0
      %p78 = por %p76, %p77
      %p79 = scmp.ne.s32.totalorder %s67, %s68
      %p80 = scmp.eq.s32.totalorder %s16, 1
      %p81 = por %p79, %p80
      %p83 = scmp.ne.s32.totalorder %s68, %s82
      %p84 = scmp.eq.s32.totalorder %s16, 0
      %p85 = por %p83, %p84
      %s86 = ssub.s32 %s10, %s17
      %p87 = scmp.eq.s32.totalorder %s86, 0
      %s89 = sadd.s32 %s88, 1
      %s90 = scalar_select %p87, %s88, %s89
      %p93 = pneg %p87
      %p94 = scmp.eq.s32.totalorder %s10, 1
      %p95 = por %p93, %p94
      %p96 = scmp.ne.s32.totalorder %s88, %s91
      %p97 = scmp.eq.s32.totalorder %s10, 0
      %p98 = por %p96, %p97
      %p99 = scmp.ne.s32.totalorder %s88, %s91
      %p100 = scmp.eq.s32.totalorder %s15, 1
      %p101 = por %p99, %p100
      %p102 = scmp.ne.s32.totalorder %s91, %s92
      %p103 = scmp.eq.s32.totalorder %s15, 0
      %p104 = por %p102, %p103
      %p105 = scmp.ne.s32.totalorder %s91, %s92
      %p106 = scmp.eq.s32.totalorder %s16, 1
      %p107 = por %p105, %p106
      %p109 = scmp.ne.s32.totalorder %s92, %s108
      %p110 = scmp.eq.s32.totalorder %s16, 0
      %p111 = por %p109, %p110
      %p112 = scmp.le.s32.totalorder 1, %s10
      %p113 = scmp.lt.s32.totalorder %s10, 3
      %p114 = pnand %p112, %p113
      %p115 = pneg %p114
      // Predicated region
      $region9: #{nn_original_gravity_forward.1} parent=5 // pred_check
        _
      $region10: #{nn_original_gravity_forward.1} parent=5 // pred_check_branch
        %117 = sbr.rel (%p114) target = $region12
      $region11: #{nn_original_gravity_forward.1} parent=5 // pred_region
        %s118 = ssub.s32 %s10, 1
        // Predicated region
        $region13: #{nn_original_gravity_forward.1} parent=11 // pred_check
          %p119 = pneg %p57
        $region14: #{nn_original_gravity_forward.1} parent=11 // pred_check_branch
          %121 = sbr.rel (%p119) target = $region16
        $region15: #{nn_original_gravity_forward.1} parent=11 // pred_region
          _
        $region16: #{nn_original_gravity_forward.1} parent=11 // pred_fallthru
          _
        // Predicated region
        $region17: #{nn_original_gravity_forward.1} parent=11 // pred_check
          %p122 = pneg %p78
        $region18: #{nn_original_gravity_forward.1} parent=11 // pred_check_branch
          %124 = sbr.rel (%p122) target = $region20
        $region19: #{nn_original_gravity_forward.1} parent=11 // pred_region
          _
        $region20: #{nn_original_gravity_forward.1} parent=11 // pred_fallthru
          _
      $region12: #{nn_original_gravity_forward.1} parent=5 // pred_fallthru
        _
      %p125 = scmp.lt.s32.totalorder %s10, 2
      // Predicated region
      $region21: #{nn_original_gravity_forward.1} parent=5 // pred_check
        %p126 = pneg %p125
      $region22: #{nn_original_gravity_forward.1} parent=5 // pred_check_branch
        %128 = sbr.rel (%p126) target = $region24
      $region23: #{nn_original_gravity_forward.1} parent=5 // pred_region
        // Predicated region
        $region25: #{nn_original_gravity_forward.1} parent=23 // pred_check
          %p129 = pneg %p30
        $region26: #{nn_original_gravity_forward.1} parent=23 // pred_check_branch
          %131 = sbr.rel (%p129) target = $region28
        $region27: #{nn_original_gravity_forward.1} parent=23 // pred_region
          %s132 = smul.u32 38, %s10
          %s133 = ssub.s32 75, %s132
          %p134 = scmp.lt.s32.totalorder %s133, 38
          %s135 = scalar_select %p134, %s133, 38
          %s136 = smul.u32 128, %s135
          %p137 = scmp.lt.s32.totalorder %s132, 74
          %s138 = scalar_select %p137, %s132, 74
          %s139 = smul.addr %s138, 8
          %s140 = scalar_lea.vmem %s0, %s139
          %s141 = smul.u32 38, %s10
          %s142 = ssub.s32 75, %s141
          %p143 = scmp.lt.s32.totalorder %s142, 38
          %s144 = scalar_select %p143, %s142, 38
          %s145 = smul.u32 128, %s144
        $region28: #{nn_original_gravity_forward.1} parent=23 // pred_fallthru
          _
      $region24: #{nn_original_gravity_forward.1} parent=5 // pred_fallthru
        _
      %p146 = scmp.le.s32.totalorder 1, %s10
      %p147 = scmp.lt.s32.totalorder %s10, 3
      %p148 = pnand %p146, %p147
      %p149 = pneg %p148
      // Predicated region
      $region29: #{nn_original_gravity_forward.1} parent=5 // pred_check
        _
      $region30: #{nn_original_gravity_forward.1} parent=5 // pred_check_branch
        %151 = sbr.rel (%p148) target = $region32
      $region31: #{nn_original_gravity_forward.1} parent=5 // pred_region
        %s152 = ssub.s32 %s10, 1
        %s153 = smul.u32 38, %s15
        %s154 = ssub.s32 75, %s153
        %p155 = scmp.lt.s32.totalorder %s154, 38
        %s156 = scalar_select %p155, %s154, 38
        %s157 = smul.u32 128, %s156
        %p158 = scmp.lt.s32.totalorder %s153, 74
        %s159 = scalar_select %p158, %s153, 74
        %s160 = smul.addr %s159, 8
        %s161 = scalar_lea.vmem %s0, %s160
        %p162 = pneg %p36
        %p163 = pneg %p33
        %p164 = pneg %p57
        %p165 = pneg %p54
        %p166 = pneg %p78
        %p167 = pneg %p75
        %p168 = pneg %p104
        %p169 = pneg %p101
        %s170 = sand.u32 %s91, 1
        %s171 = sand.u32 %s91, 1
        %s172 = smul.addr %s171, 304
        %s173 = scalar_lea.vmem [#allocation3], %s172
        %s174 = smul.u32 38, %s15
        %s175 = ssub.s32 75, %s174
        %p176 = scmp.lt.s32.totalorder %s175, 38
        %s177 = scalar_select %p176, %s175, 38
        %s178 = smul.u32 128, %s177
        %p179 = scmp.lt.s32.totalorder %s174, 74
        %s180 = scalar_select %p179, %s174, 74
        %s181 = smul.addr %s180, 8
        %s182 = scalar_lea.vmem %s0, %s181
        %s183 = smul.u32 38, %s15
        %s184 = ssub.s32 75, %s183
        %p185 = scmp.lt.s32.totalorder %s184, 38
        %s186 = scalar_select %p185, %s184, 38
        %s187 = smul.u32 128, %s186
        %s188 = smul.u32 38, %s15
        %s189 = ssub.s32 75, %s188
        %p190 = scmp.lt.s32.totalorder %s189, 38
        %s191 = scalar_select %p190, %s189, 38
        %s192 = smul.u32 128, %s191
        %v193 = vld [vmem:[%s182] sm:$0xff]
        %v194 = vld [vmem:[%s182 + $0x8] sm:$0xff]
        %v195 = vld [vmem:[%s182 + $0x10] sm:$0xff]
        %v196 = vld [vmem:[%s182 + $0x18] sm:$0xff]
        %v197 = vld [vmem:[%s182 + $0x20] sm:$0xff]
        %v198 = vld [vmem:[%s182 + $0x28] sm:$0xff]
        %v199 = vld [vmem:[%s182 + $0x30] sm:$0xff]
        %v200 = vld [vmem:[%s182 + $0x38] sm:$0xff]
        %v201 = vld [vmem:[%s182 + $0x40] sm:$0xff]
        %v202 = vld [vmem:[%s182 + $0x48] sm:$0xff]
        %v203 = vld [vmem:[%s182 + $0x50] sm:$0xff]
        %v204 = vld [vmem:[%s182 + $0x58] sm:$0xff]
        %v205 = vld [vmem:[%s182 + $0x60] sm:$0xff]
        %v206 = vld [vmem:[%s182 + $0x68] sm:$0xff]
        %v207 = vld [vmem:[%s182 + $0x70] sm:$0xff]
        %v208 = vld [vmem:[%s182 + $0x78] sm:$0xff]
        %v209 = vld [vmem:[%s182 + $0x80] sm:$0xff]
        %v210 = vld [vmem:[%s182 + $0x88] sm:$0xff]
        %v211 = vld [vmem:[%s182 + $0x90] sm:$0xff]
        %v212 = vld [vmem:[%s182 + $0x98] sm:$0xff]
        %v213 = vld [vmem:[%s182 + $0xa0] sm:$0xff]
        %v214 = vld [vmem:[%s182 + $0xa8] sm:$0xff]
        %v215 = vld [vmem:[%s182 + $0xb0] sm:$0xff]
        %v216 = vld [vmem:[%s182 + $0xb8] sm:$0xff]
        %v217 = vld [vmem:[%s182 + $0xc0] sm:$0xff]
        %v218 = vld [vmem:[%s182 + $0xc8] sm:$0xff]
        %v219 = vld [vmem:[%s182 + $0xd0] sm:$0xff]
        %v220 = vld [vmem:[%s182 + $0xd8] sm:$0xff]
        %v221 = vld [vmem:[%s182 + $0xe0] sm:$0xff]
        %v222 = vld [vmem:[%s182 + $0xe8] sm:$0xff]
        %v223 = vld [vmem:[%s182 + $0xf0] sm:$0xff]
        %v224 = vld [vmem:[%s182 + $0xf8] sm:$0xff]
        %v225 = vld [vmem:[%s182 + $0x100] sm:$0xff]
        %v226 = vld [vmem:[%s182 + $0x108] sm:$0xff]
        %v227 = vld [vmem:[%s182 + $0x110] sm:$0xff]
        %v228 = vld [vmem:[%s182 + $0x118] sm:$0xff]
        %v229 = vld [vmem:[%s182 + $0x120] sm:$0xff]
        %v230 = vld [vmem:[%s182 + $0x128] sm:$0xff]
        %v231 = vld [vmem:[%s1] sm:$0xff]
        %v232 = vld [vmem:[%s1 + $0x8] sm:$0xff]
        %v233 = vld [vmem:[%s1 + $0x10] sm:$0xff]
        %v234 = vld [vmem:[%s1 + $0x18] sm:$0xff]
        %v235 = vld [vmem:[%s1 + $0x20] sm:$0xff]
        %v236 = vld [vmem:[%s1 + $0x28] sm:$0xff]
        %v237 = vld [vmem:[%s1 + $0x30] sm:$0xff]
        %v238 = vld [vmem:[%s1 + $0x38] sm:$0xff]
        %v239 = vld [vmem:[%s1 + $0x40] sm:$0xff]
        %v240 = vld [vmem:[%s1 + $0x48] sm:$0xff]
        %v241 = vld [vmem:[%s1 + $0x50] sm:$0xff]
        %v242 = vld [vmem:[%s1 + $0x58] sm:$0xff]
        %v243 = vld [vmem:[%s1 + $0x60] sm:$0xff]
        %v244 = vld [vmem:[%s1 + $0x68] sm:$0xff]
        %v245 = vld [vmem:[%s1 + $0x70] sm:$0xff]
        %v246 = vld [vmem:[%s1 + $0x78] sm:$0xff]
        %s247 = sld [smem:[#allocation2]]
        %v248 = vstv %s247
        %249 = vmatprep.subr.mxu0 0.0
        %250 = vmatpush1.msra.mxu0 %v231
        %251 = vmatprep.subr.mxu0 0.0
        %252 = vmatpush1.msra.mxu0 %v232
        %253 = vmatprep.subr.mxu0 0.0
        %254 = vmatpush1.msra.mxu0 %v233
        %255 = vmatprep.subr.mxu0 0.0
        %256 = vmatpush1.msra.mxu0 %v234
        %257 = vmatprep.subr.mxu0 0.0
        %258 = vmatpush1.msra.mxu0 %v235
        %259 = vmatprep.subr.mxu0 0.0
        %260 = vmatpush1.msra.mxu0 %v236
        %261 = vmatprep.subr.mxu0 0.0
        %262 = vmatpush1.msra.mxu0 %v237
        %263 = vmatprep.subr.mxu0 0.0
        %264 = vmatpush1.msra.mxu0 %v238
        %265 = vmatprep.subr.mxu0 0.0
        %266 = vmatpush1.msra.mxu0 %v239
        %267 = vmatprep.subr.mxu0 0.0
        %268 = vmatpush1.msra.mxu0 %v240
        %269 = vmatprep.subr.mxu0 0.0
        %270 = vmatpush1.msra.mxu0 %v241
        %271 = vmatprep.subr.mxu0 0.0
        %272 = vmatpush1.msra.mxu0 %v242
        %273 = vmatprep.subr.mxu0 0.0
        %274 = vmatpush1.msra.mxu0 %v243
        %275 = vmatprep.subr.mxu0 0.0
        %276 = vmatpush1.msra.mxu0 %v244
        %277 = vmatprep.subr.mxu0 0.0
        %278 = vmatpush1.msra.mxu0 %v245
        %279 = vmatprep.subr.mxu0 0.0
        %280 = vmatpush1.msra.mxu0 %v246
        %281 = vmatprep.subr.mxu0 0.0
        %282 = vmatpush1.msra.mxu0 0.0
        %283 = vmatprep.subr.mxu0 0.0
        %284 = vmatpush1.msra.mxu0 0.0
        %285 = vmatprep.subr.mxu0 0.0
        %286 = vmatpush1.msra.mxu0 0.0
        %287 = vmatprep.subr.mxu0 0.0
        %288 = vmatpush1.msra.mxu0 0.0
        %289 = vmatprep.subr.mxu0 0.0
        %290 = vmatpush1.msra.mxu0 0.0
        %291 = vmatprep.subr.mxu0 0.0
        %292 = vmatpush1.msra.mxu0 0.0
        %293 = vmatprep.subr.mxu0 0.0
        %294 = vmatpush1.msra.mxu0 0.0
        %295 = vmatprep.subr.mxu0 0.0
        %296 = vmatpush1.msra.mxu0 0.0
        %297 = vmatprep.subr.mxu0 0.0
        %298 = vmatpush1.msra.mxu0 0.0
        %299 = vmatprep.subr.mxu0 0.0
        %300 = vmatpush1.msra.mxu0 0.0
        %301 = vmatprep.subr.mxu0 0.0
        %302 = vmatpush1.msra.mxu0 0.0
        %303 = vmatprep.subr.mxu0 0.0
        %304 = vmatpush1.msra.mxu0 0.0
        %305 = vmatprep.subr.mxu0 0.0
        %306 = vmatpush1.msra.mxu0 0.0
        %307 = vmatprep.subr.mxu0 0.0
        %308 = vmatpush1.msra.mxu0 0.0
        %309 = vmatprep.subr.mxu0 0.0
        %310 = vmatpush1.msra.mxu0 0.0
        %311 = vmatprep.subr.mxu0 0.0
        %312 = vmatpush1.msra.mxu0 0.0
        %313 = vmatprep.mubr.f32.mxu0 0.0
        %314 = vmatmul.mubr.f32.gmra.mrb[0].mxu0 %v193
        %v315 = vpop.f32.mrb[0].mxu0
        %v316 = vadd.f32 %v248, %v315
        %v317 = vpop.f32.mrb[0].mxu0
        %318 = vmatprep.mubr.f32.mxu0 0.0
        %319 = vmatmul.mubr.f32.gmra.mrb[0].mxu0 %v194
        %v320 = vpop.f32.mrb[0].mxu0
        %v321 = vadd.f32 %v248, %v320
        %v322 = vpop.f32.mrb[0].mxu0
        %323 = vmatprep.mubr.f32.mxu0 0.0
        %324 = vmatmul.mubr.f32.gmra.mrb[0].mxu0 %v195
        %v325 = vpop.f32.mrb[0].mxu0
        %v326 = vadd.f32 %v248, %v325
        %v327 = vpop.f32.mrb[0].mxu0
        %328 = vmatprep.mubr.f32.mxu0 0.0
        %329 = vmatmul.mubr.f32.gmra.mrb[0].mxu0 %v196
        %v330 = vpop.f32.mrb[0].mxu0
        %v331 = vadd.f32 %v248, %v330
        %v332 = vpop.f32.mrb[0].mxu0
        %333 = vmatprep.mubr.f32.mxu0 0.0
        %334 = vmatmul.mubr.f32.gmra.mrb[0].mxu0 %v197
        %v335 = vpop.f32.mrb[0].mxu0
        %v336 = vadd.f32 %v248, %v335
        %v337 = vpop.f32.mrb[0].mxu0
        %338 = vmatprep.mubr.f32.mxu0 0.0
        %339 = vmatmul.mubr.f32.gmra.mrb[0].mxu0 %v198
        %v340 = vpop.f32.mrb[0].mxu0
        %v341 = vadd.f32 %v248, %v340
        %v342 = vpop.f32.mrb[0].mxu0
        %343 = vmatprep.mubr.f32.mxu0 0.0
        %344 = vmatmul.mubr.f32.gmra.mrb[0].mxu0 %v199
        %v345 = vpop.f32.mrb[0].mxu0
        %v346 = vadd.f32 %v248, %v345
        %v347 = vpop.f32.mrb[0].mxu0
        %348 = vmatprep.mubr.f32.mxu0 0.0
        %349 = vmatmul.mubr.f32.gmra.mrb[0].mxu0 %v200
        %v350 = vpop.f32.mrb[0].mxu0
        %v351 = vadd.f32 %v248, %v350
        %v352 = vpop.f32.mrb[0].mxu0
        %353 = vmatprep.mubr.f32.mxu0 0.0
        %354 = vmatmul.mubr.f32.gmra.mrb[0].mxu0 %v201
        %v355 = vpop.f32.mrb[0].mxu0
        %v356 = vadd.f32 %v248, %v355
        %v357 = vpop.f32.mrb[0].mxu0
        %358 = vmatprep.mubr.f32.mxu0 0.0
        %359 = vmatmul.mubr.f32.gmra.mrb[0].mxu0 %v202
        %v360 = vpop.f32.mrb[0].mxu0
        %v361 = vadd.f32 %v248, %v360
        %v362 = vpop.f32.mrb[0].mxu0
        %363 = vmatprep.mubr.f32.mxu0 0.0
        %364 = vmatmul.mubr.f32.gmra.mrb[0].mxu0 %v203
        %v365 = vpop.f32.mrb[0].mxu0
        %v366 = vadd.f32 %v248, %v365
        %v367 = vpop.f32.mrb[0].mxu0
        %368 = vmatprep.mubr.f32.mxu0 0.0
        %369 = vmatmul.mubr.f32.gmra.mrb[0].mxu0 %v204
        %v370 = vpop.f32.mrb[0].mxu0
        %v371 = vadd.f32 %v248, %v370
        %v372 = vpop.f32.mrb[0].mxu0
        %373 = vmatprep.mubr.f32.mxu0 0.0
        %374 = vmatmul.mubr.f32.gmra.mrb[0].mxu0 %v205
        %v375 = vpop.f32.mrb[0].mxu0
        %v376 = vadd.f32 %v248, %v375
        %v377 = vpop.f32.mrb[0].mxu0
        %378 = vmatprep.mubr.f32.mxu0 0.0
        %379 = vmatmul.mubr.f32.gmra.mrb[0].mxu0 %v206
        %v380 = vpop.f32.mrb[0].mxu0
        %v381 = vadd.f32 %v248, %v380
        %v382 = vpop.f32.mrb[0].mxu0
        %383 = vmatprep.mubr.f32.mxu0 0.0
        %384 = vmatmul.mubr.f32.gmra.mrb[0].mxu0 %v207
        %v385 = vpop.f32.mrb[0].mxu0
        %v386 = vadd.f32 %v248, %v385
        %v387 = vpop.f32.mrb[0].mxu0
        %388 = vmatprep.mubr.f32.mxu0 0.0
        %389 = vmatmul.mubr.f32.gmra.mrb[0].mxu0 %v208
        %v390 = vpop.f32.mrb[0].mxu0
        %v391 = vadd.f32 %v248, %v390
        %v392 = vpop.f32.mrb[0].mxu0
        %393 = vmatprep.mubr.f32.mxu0 0.0
        %394 = vmatmul.mubr.f32.gmra.mrb[0].mxu0 %v209
        %v395 = vpop.f32.mrb[0].mxu0
        %v396 = vadd.f32 %v248, %v395
        %v397 = vpop.f32.mrb[0].mxu0
        %398 = vmatprep.mubr.f32.mxu0 0.0
        %399 = vmatmul.mubr.f32.gmra.mrb[0].mxu0 %v210
        %v400 = vpop.f32.mrb[0].mxu0
        %v401 = vadd.f32 %v248, %v400
        %v402 = vpop.f32.mrb[0].mxu0
        %403 = vmatprep.mubr.f32.mxu0 0.0
        %404 = vmatmul.mubr.f32.gmra.mrb[0].mxu0 %v211
        %v405 = vpop.f32.mrb[0].mxu0
        %v406 = vadd.f32 %v248, %v405
        %v407 = vpop.f32.mrb[0].mxu0
        %408 = vmatprep.mubr.f32.mxu0 0.0
        %409 = vmatmul.mubr.f32.gmra.mrb[0].mxu0 %v212
        %v410 = vpop.f32.mrb[0].mxu0
        %v411 = vadd.f32 %v248, %v410
        %v412 = vpop.f32.mrb[0].mxu0
        %413 = vmatprep.mubr.f32.mxu0 0.0
        %414 = vmatmul.mubr.f32.gmra.mrb[0].mxu0 %v213
        %v415 = vpop.f32.mrb[0].mxu0
        %v416 = vadd.f32 %v248, %v415
        %v417 = vpop.f32.mrb[0].mxu0
        %418 = vmatprep.mubr.f32.mxu0 0.0
        %419 = vmatmul.mubr.f32.gmra.mrb[0].mxu0 %v214
        %v420 = vpop.f32.mrb[0].mxu0
        %v421 = vadd.f32 %v248, %v420
        %v422 = vpop.f32.mrb[0].mxu0
        %423 = vmatprep.mubr.f32.mxu0 0.0
        %424 = vmatmul.mubr.f32.gmra.mrb[0].mxu0 %v215
        %v425 = vpop.f32.mrb[0].mxu0
        %v426 = vadd.f32 %v248, %v425
        %v427 = vpop.f32.mrb[0].mxu0
        %428 = vmatprep.mubr.f32.mxu0 0.0
        %429 = vmatmul.mubr.f32.gmra.mrb[0].mxu0 %v216
        %v430 = vpop.f32.mrb[0].mxu0
        %v431 = vadd.f32 %v248, %v430
        %v432 = vpop.f32.mrb[0].mxu0
        %433 = vmatprep.mubr.f32.mxu0 0.0
        %434 = vmatmul.mubr.f32.gmra.mrb[0].mxu0 %v217
        %v435 = vpop.f32.mrb[0].mxu0
        %v436 = vadd.f32 %v248, %v435
        %v437 = vpop.f32.mrb[0].mxu0
        %438 = vmatprep.mubr.f32.mxu0 0.0
        %439 = vmatmul.mubr.f32.gmra.mrb[0].mxu0 %v218
        %v440 = vpop.f32.mrb[0].mxu0
        %v441 = vadd.f32 %v248, %v440
        %v442 = vpop.f32.mrb[0].mxu0
        %443 = vmatprep.mubr.f32.mxu0 0.0
        %444 = vmatmul.mubr.f32.gmra.mrb[0].mxu0 %v219
        %v445 = vpop.f32.mrb[0].mxu0
        %v446 = vadd.f32 %v248, %v445
        %v447 = vpop.f32.mrb[0].mxu0
        %448 = vmatprep.mubr.f32.mxu0 0.0
        %449 = vmatmul.mubr.f32.gmra.mrb[0].mxu0 %v220
        %v450 = vpop.f32.mrb[0].mxu0
        %v451 = vadd.f32 %v248, %v450
        %v452 = vpop.f32.mrb[0].mxu0
        %453 = vmatprep.mubr.f32.mxu0 0.0
        %454 = vmatmul.mubr.f32.gmra.mrb[0].mxu0 %v221
        %v455 = vpop.f32.mrb[0].mxu0
        %v456 = vadd.f32 %v248, %v455
        %v457 = vpop.f32.mrb[0].mxu0
        %458 = vmatprep.mubr.f32.mxu0 0.0
        %459 = vmatmul.mubr.f32.gmra.mrb[0].mxu0 %v222
        %v460 = vpop.f32.mrb[0].mxu0
        %v461 = vadd.f32 %v248, %v460
        %v462 = vpop.f32.mrb[0].mxu0
        %463 = vmatprep.mubr.f32.mxu0 0.0
        %464 = vmatmul.mubr.f32.gmra.mrb[0].mxu0 %v223
        %v465 = vpop.f32.mrb[0].mxu0
        %v466 = vadd.f32 %v248, %v465
        %v467 = vpop.f32.mrb[0].mxu0
        %468 = vmatprep.mubr.f32.mxu0 0.0
        %469 = vmatmul.mubr.f32.gmra.mrb[0].mxu0 %v224
        %v470 = vpop.f32.mrb[0].mxu0
        %v471 = vadd.f32 %v248, %v470
        %v472 = vpop.f32.mrb[0].mxu0
        %473 = vmatprep.mubr.f32.mxu0 0.0
        %474 = vmatmul.mubr.f32.gmra.mrb[0].mxu0 %v225
        %v475 = vpop.f32.mrb[0].mxu0
        %v476 = vadd.f32 %v248, %v475
        %v477 = vpop.f32.mrb[0].mxu0
        %478 = vmatprep.mubr.f32.mxu0 0.0
        %479 = vmatmul.mubr.f32.gmra.mrb[0].mxu0 %v226
        %v480 = vpop.f32.mrb[0].mxu0
        %v481 = vadd.f32 %v248, %v480
        %v482 = vpop.f32.mrb[0].mxu0
        %483 = vmatprep.mubr.f32.mxu0 0.0
        %484 = vmatmul.mubr.f32.gmra.mrb[0].mxu0 %v227
        %v485 = vpop.f32.mrb[0].mxu0
        %v486 = vadd.f32 %v248, %v485
        %v487 = vpop.f32.mrb[0].mxu0
        %488 = vmatprep.mubr.f32.mxu0 0.0
        %489 = vmatmul.mubr.f32.gmra.mrb[0].mxu0 %v228
        %v490 = vpop.f32.mrb[0].mxu0
        %v491 = vadd.f32 %v248, %v490
        %v492 = vpop.f32.mrb[0].mxu0
        %493 = vmatprep.mubr.f32.mxu0 0.0
        %494 = vmatmul.mubr.f32.gmra.mrb[0].mxu0 %v229
        %v495 = vpop.f32.mrb[0].mxu0
        %v496 = vadd.f32 %v248, %v495
        %v497 = vpop.f32.mrb[0].mxu0
        %498 = vmatprep.mubr.f32.mxu0 0.0
        %499 = vmatmul.mubr.f32.gmra.mrb[0].mxu0 %v230
        %v500 = vpop.f32.mrb[0].mxu0
        %v501 = vadd.f32 %v248, %v500
        %v502 = vpop.f32.mrb[0].mxu0
        %503 = vdwg.mxu0
        %vm504 = vcmask 31744
        %505 = vst.msk [vmem:[%s173] sm:$0xff] %vm504, %v316
        %506 = vst.msk [vmem:[%s173 + $0x8] sm:$0xff] %vm504, %v321
        %507 = vst.msk [vmem:[%s173 + $0x10] sm:$0xff] %vm504, %v326
        %508 = vst.msk [vmem:[%s173 + $0x18] sm:$0xff] %vm504, %v331
        %509 = vst.msk [vmem:[%s173 + $0x20] sm:$0xff] %vm504, %v336
        %510 = vst.msk [vmem:[%s173 + $0x28] sm:$0xff] %vm504, %v341
        %511 = vst.msk [vmem:[%s173 + $0x30] sm:$0xff] %vm504, %v346
        %512 = vst.msk [vmem:[%s173 + $0x38] sm:$0xff] %vm504, %v351
        %513 = vst.msk [vmem:[%s173 + $0x40] sm:$0xff] %vm504, %v356
        %514 = vst.msk [vmem:[%s173 + $0x48] sm:$0xff] %vm504, %v361
        %515 = vst.msk [vmem:[%s173 + $0x50] sm:$0xff] %vm504, %v366
        %516 = vst.msk [vmem:[%s173 + $0x58] sm:$0xff] %vm504, %v371
        %517 = vst.msk [vmem:[%s173 + $0x60] sm:$0xff] %vm504, %v376
        %518 = vst.msk [vmem:[%s173 + $0x68] sm:$0xff] %vm504, %v381
        %519 = vst.msk [vmem:[%s173 + $0x70] sm:$0xff] %vm504, %v386
        %520 = vst.msk [vmem:[%s173 + $0x78] sm:$0xff] %vm504, %v391
        %521 = vst.msk [vmem:[%s173 + $0x80] sm:$0xff] %vm504, %v396
        %522 = vst.msk [vmem:[%s173 + $0x88] sm:$0xff] %vm504, %v401
        %523 = vst.msk [vmem:[%s173 + $0x90] sm:$0xff] %vm504, %v406
        %524 = vst.msk [vmem:[%s173 + $0x98] sm:$0xff] %vm504, %v411
        %525 = vst.msk [vmem:[%s173 + $0xa0] sm:$0xff] %vm504, %v416
        %526 = vst.msk [vmem:[%s173 + $0xa8] sm:$0xff] %vm504, %v421
        %527 = vst.msk [vmem:[%s173 + $0xb0] sm:$0xff] %vm504, %v426
        %528 = vst.msk [vmem:[%s173 + $0xb8] sm:$0xff] %vm504, %v431
        %529 = vst.msk [vmem:[%s173 + $0xc0] sm:$0xff] %vm504, %v436
        %530 = vst.msk [vmem:[%s173 + $0xc8] sm:$0xff] %vm504, %v441
        %531 = vst.msk [vmem:[%s173 + $0xd0] sm:$0xff] %vm504, %v446
        %532 = vst.msk [vmem:[%s173 + $0xd8] sm:$0xff] %vm504, %v451
        %533 = vst.msk [vmem:[%s173 + $0xe0] sm:$0xff] %vm504, %v456
        %534 = vst.msk [vmem:[%s173 + $0xe8] sm:$0xff] %vm504, %v461
        %535 = vst.msk [vmem:[%s173 + $0xf0] sm:$0xff] %vm504, %v466
        %536 = vst.msk [vmem:[%s173 + $0xf8] sm:$0xff] %vm504, %v471
        %537 = vst.msk [vmem:[%s173 + $0x100] sm:$0xff] %vm504, %v476
        %538 = vst.msk [vmem:[%s173 + $0x108] sm:$0xff] %vm504, %v481
        %539 = vst.msk [vmem:[%s173 + $0x110] sm:$0xff] %vm504, %v486
        %540 = vst.msk [vmem:[%s173 + $0x118] sm:$0xff] %vm504, %v491
        %541 = vst.msk [vmem:[%s173 + $0x120] sm:$0xff] %vm504, %v496
        %542 = vst.msk [vmem:[%s173 + $0x128] sm:$0xff] %vm504, %v501
        %s543 = sand.u32 %s91, 1
        %s544 = sand.u32 %s91, 1
        %s545 = smul.addr %s544, 304
        %s546 = scalar_lea.vmem [#allocation3], %s545
        // Predicated region
        $region33: #{nn_original_gravity_forward.1} parent=31 // pred_check
          %p547 = pneg %p101
        $region34: #{nn_original_gravity_forward.1} parent=31 // pred_check_branch
          %549 = sbr.rel (%p547) target = $region36
        $region35: #{nn_original_gravity_forward.1} parent=31 // pred_region
          %s550 = smul.u32 38, %s15
          %s551 = ssub.s32 75, %s550
          %p552 = scmp.lt.s32.totalorder %s551, 38
          %s553 = scalar_select %p552, %s551, 38
          %s554 = smul.u32 128, %s553
          %p555 = scmp.ne.s32.totalorder 0, %s554
          %s556 = smul.addr %s550, 8
          %s557 = scalar_lea.vmem %s3, %s556
          // Predicated region
          $region37: #{nn_original_gravity_forward.1} parent=35 // pred_check
            %p558 = pneg %p555
          $region38: #{nn_original_gravity_forward.1} parent=35 // pred_check_branch
            %560 = sbr.rel (%p558) target = $region40
          $region39: #{nn_original_gravity_forward.1} parent=35 // pred_region
            // Predicated region
            $region41: #{nn_original_gravity_forward.1} parent=39 // pred_check
              _
            $region42: #{nn_original_gravity_forward.1} parent=39 // pred_check_branch
              %562 = sbr.rel (0) target = $region44
            $region43: #{nn_original_gravity_forward.1} parent=39 // pred_region
              // Predicated region
              $region63: #{nn_original_gravity_forward.1} parent=43 // pred_check
                _
              $region64: #{nn_original_gravity_forward.1} parent=43 // pred_check_branch
                %686 = sbr.rel (0) target = $region66
              $region65: #{nn_original_gravity_forward.1} parent=43 // pred_region
                %s687 = sdiv.u32.pop %s553, 38
                %s688 = srem.u32.pop %s553, 38
                // While loop
                $region67: #{nn_original_gravity_forward.1} parent=65 // loop_pre_header
                  _
                $region68: #{nn_original_gravity_forward.1} parent=65 // loop_header
                  %s690 = sphi 0, %s692
                  %p691 = scmp.ge.s32.totalorder %s690, %s687
                  %s695 = sphi 0, %s776
                  %s696 = sphi %s546, %s779
                  %s697 = sphi %s557, %s780
                $region69: #{nn_original_gravity_forward.1} parent=65 // loop_header_branch
                  %694 = sbr.rel (%p691) target = $region73
                $region70: #{nn_original_gravity_forward.1} parent=65 // loop_body
                  %v698 = vld [vmem:[%s696] sm:$0xff]
                  %699 = vst [vmem:[%s697] sm:$0xff] %v698
                  %v700 = vld [vmem:[%s696 + $0x8] sm:$0xff]
                  %701 = vst [vmem:[%s697 + $0x8] sm:$0xff] %v700
                  %v702 = vld [vmem:[%s696 + $0x10] sm:$0xff]
                  %703 = vst [vmem:[%s697 + $0x10] sm:$0xff] %v702
                  %v704 = vld [vmem:[%s696 + $0x18] sm:$0xff]
                  %705 = vst [vmem:[%s697 + $0x18] sm:$0xff] %v704
                  %v706 = vld [vmem:[%s696 + $0x20] sm:$0xff]
                  %707 = vst [vmem:[%s697 + $0x20] sm:$0xff] %v706
                  %v708 = vld [vmem:[%s696 + $0x28] sm:$0xff]
                  %709 = vst [vmem:[%s697 + $0x28] sm:$0xff] %v708
                  %v710 = vld [vmem:[%s696 + $0x30] sm:$0xff]
                  %711 = vst [vmem:[%s697 + $0x30] sm:$0xff] %v710
                  %v712 = vld [vmem:[%s696 + $0x38] sm:$0xff]
                  %713 = vst [vmem:[%s697 + $0x38] sm:$0xff] %v712
                  %v714 = vld [vmem:[%s696 + $0x40] sm:$0xff]
                  %715 = vst [vmem:[%s697 + $0x40] sm:$0xff] %v714
                  %v716 = vld [vmem:[%s696 + $0x48] sm:$0xff]
                  %717 = vst [vmem:[%s697 + $0x48] sm:$0xff] %v716
                  %v718 = vld [vmem:[%s696 + $0x50] sm:$0xff]
                  %719 = vst [vmem:[%s697 + $0x50] sm:$0xff] %v718
                  %v720 = vld [vmem:[%s696 + $0x58] sm:$0xff]
                  %721 = vst [vmem:[%s697 + $0x58] sm:$0xff] %v720
                  %v722 = vld [vmem:[%s696 + $0x60] sm:$0xff]
                  %723 = vst [vmem:[%s697 + $0x60] sm:$0xff] %v722
                  %v724 = vld [vmem:[%s696 + $0x68] sm:$0xff]
                  %725 = vst [vmem:[%s697 + $0x68] sm:$0xff] %v724
                  %v726 = vld [vmem:[%s696 + $0x70] sm:$0xff]
                  %727 = vst [vmem:[%s697 + $0x70] sm:$0xff] %v726
                  %v728 = vld [vmem:[%s696 + $0x78] sm:$0xff]
                  %729 = vst [vmem:[%s697 + $0x78] sm:$0xff] %v728
                  %v730 = vld [vmem:[%s696 + $0x80] sm:$0xff]
                  %731 = vst [vmem:[%s697 + $0x80] sm:$0xff] %v730
                  %v732 = vld [vmem:[%s696 + $0x88] sm:$0xff]
                  %733 = vst [vmem:[%s697 + $0x88] sm:$0xff] %v732
                  %v734 = vld [vmem:[%s696 + $0x90] sm:$0xff]
                  %735 = vst [vmem:[%s697 + $0x90] sm:$0xff] %v734
                  %v736 = vld [vmem:[%s696 + $0x98] sm:$0xff]
                  %737 = vst [vmem:[%s697 + $0x98] sm:$0xff] %v736
                  %v738 = vld [vmem:[%s696 + $0xa0] sm:$0xff]
                  %739 = vst [vmem:[%s697 + $0xa0] sm:$0xff] %v738
                  %v740 = vld [vmem:[%s696 + $0xa8] sm:$0xff]
                  %741 = vst [vmem:[%s697 + $0xa8] sm:$0xff] %v740
                  %v742 = vld [vmem:[%s696 + $0xb0] sm:$0xff]
                  %743 = vst [vmem:[%s697 + $0xb0] sm:$0xff] %v742
                  %v744 = vld [vmem:[%s696 + $0xb8] sm:$0xff]
                  %745 = vst [vmem:[%s697 + $0xb8] sm:$0xff] %v744
                  %v746 = vld [vmem:[%s696 + $0xc0] sm:$0xff]
                  %747 = vst [vmem:[%s697 + $0xc0] sm:$0xff] %v746
                  %v748 = vld [vmem:[%s696 + $0xc8] sm:$0xff]
                  %749 = vst [vmem:[%s697 + $0xc8] sm:$0xff] %v748
                  %v750 = vld [vmem:[%s696 + $0xd0] sm:$0xff]
                  %751 = vst [vmem:[%s697 + $0xd0] sm:$0xff] %v750
                  %v752 = vld [vmem:[%s696 + $0xd8] sm:$0xff]
                  %753 = vst [vmem:[%s697 + $0xd8] sm:$0xff] %v752
                  %v754 = vld [vmem:[%s696 + $0xe0] sm:$0xff]
                  %755 = vst [vmem:[%s697 + $0xe0] sm:$0xff] %v754
                  %v756 = vld [vmem:[%s696 + $0xe8] sm:$0xff]
                  %757 = vst [vmem:[%s697 + $0xe8] sm:$0xff] %v756
                  %v758 = vld [vmem:[%s696 + $0xf0] sm:$0xff]
                  %759 = vst [vmem:[%s697 + $0xf0] sm:$0xff] %v758
                  %v760 = vld [vmem:[%s696 + $0xf8] sm:$0xff]
                  %761 = vst [vmem:[%s697 + $0xf8] sm:$0xff] %v760
                  %v762 = vld [vmem:[%s696 + $0x100] sm:$0xff]
                  %763 = vst [vmem:[%s697 + $0x100] sm:$0xff] %v762
                  %v764 = vld [vmem:[%s696 + $0x108] sm:$0xff]
                  %765 = vst [vmem:[%s697 + $0x108] sm:$0xff] %v764
                  %v766 = vld [vmem:[%s696 + $0x110] sm:$0xff]
                  %767 = vst [vmem:[%s697 + $0x110] sm:$0xff] %v766
                  %v768 = vld [vmem:[%s696 + $0x118] sm:$0xff]
                  %769 = vst [vmem:[%s697 + $0x118] sm:$0xff] %v768
                  %v770 = vld [vmem:[%s696 + $0x120] sm:$0xff]
                  %771 = vst [vmem:[%s697 + $0x120] sm:$0xff] %v770
                  %v772 = vld [vmem:[%s696 + $0x128] sm:$0xff]
                  %773 = vst [vmem:[%s697 + $0x128] sm:$0xff] %v772
                  %s774 = sadd.s32 1, %s695
                  %p775 = scmp.ge.s32.totalorder %s774, %s687
                  %s776 = scalar_select %p775, 0, %s774
                  %s777 = smul.u32 %s776, 304
                  %s778 = smul.u32 %s776, 304
                  %s779 = scalar_lea.vmem %s546, %s777 [#allocation3]
                  %s780 = scalar_lea.vmem %s557, %s778
                $region71: #{nn_original_gravity_forward.1} parent=65 // loop_footer
                  %s692 = sadd.s32 %s690, 1
                $region72: #{nn_original_gravity_forward.1} parent=65 // loop_footer_branch
                  %689 = sbr.rel target = $region68
                $region73: #{nn_original_gravity_forward.1} parent=65 // loop_exit
                  _
                %s781 = sdiv.u32.pop %s553, 38
                %s782 = srem.u32.pop %s553, 38
                %s783 = smul.u32 %s781, 38
                %s784 = smul.u32 8, %s783
                %s785 = scalar_lea.vmem %s546, %s784 [#allocation3]
                %s786 = smul.u32 8, %s783
                %s787 = scalar_lea.vmem %s557, %s786
                // While loop
                $region74: #{nn_original_gravity_forward.1} parent=65 // loop_pre_header
                  _
                $region75: #{nn_original_gravity_forward.1} parent=65 // loop_header
                  %s789 = sphi 0, %s791
                  %p790 = scmp.ge.s32.totalorder %s789, %s782
                  %s794 = sphi 0, %s801
                  %s795 = sphi %s785, %s804
                  %s796 = sphi %s787, %s805
                $region76: #{nn_original_gravity_forward.1} parent=65 // loop_header_branch
                  %793 = sbr.rel (%p790) target = $region80
                $region77: #{nn_original_gravity_forward.1} parent=65 // loop_body
                  %v797 = vld [vmem:[%s795] sm:$0xff]
                  %798 = vst [vmem:[%s796] sm:$0xff] %v797
                  %s799 = sadd.s32 1, %s794
                  %p800 = scmp.ge.s32.totalorder %s799, %s782
                  %s801 = scalar_select %p800, 0, %s799
                  %s802 = smul.u32 %s801, 8
                  %s803 = smul.u32 %s801, 8
                  %s804 = scalar_lea.vmem %s785, %s802 [#allocation3]
                  %s805 = scalar_lea.vmem %s787, %s803
                $region78: #{nn_original_gravity_forward.1} parent=65 // loop_footer
                  %s791 = sadd.s32 %s789, 1
                $region79: #{nn_original_gravity_forward.1} parent=65 // loop_footer_branch
                  %788 = sbr.rel target = $region75
                $region80: #{nn_original_gravity_forward.1} parent=65 // loop_exit
                  _
              $region66: #{nn_original_gravity_forward.1} parent=43 // pred_fallthru
                _
              // Predicated region
              $region81: #{nn_original_gravity_forward.1} parent=43 // pred_check
                _
              $region82: #{nn_original_gravity_forward.1} parent=43 // pred_check_branch
                %807 = sbr.rel target = $region84
              $region83: #{nn_original_gravity_forward.1} parent=43 // pred_region
                _
              $region84: #{nn_original_gravity_forward.1} parent=43 // pred_fallthru
                _
            $region44: #{nn_original_gravity_forward.1} parent=39 // pred_fallthru
              _
            // Predicated region
            $region45: #{nn_original_gravity_forward.1} parent=39 // pred_check
              _
            $region46: #{nn_original_gravity_forward.1} parent=39 // pred_check_branch
              %564 = sbr.rel target = $region48
            $region47: #{nn_original_gravity_forward.1} parent=39 // pred_region
              %s566 = sdiv.u32.pop %s553, 38
              %s567 = srem.u32.pop %s553, 38
              // While loop
              $region49: #{nn_original_gravity_forward.1} parent=47 // loop_pre_header
                _
              $region50: #{nn_original_gravity_forward.1} parent=47 // loop_header
                %s569 = sphi 0, %s571
                %p570 = scmp.ge.s32.totalorder %s569, %s566
                %s574 = sphi 0, %s655
                %s575 = sphi %s546, %s658
                %s576 = sphi %s557, %s659
              $region51: #{nn_original_gravity_forward.1} parent=47 // loop_header_branch
                %573 = sbr.rel (%p570) target = $region55
              $region52: #{nn_original_gravity_forward.1} parent=47 // loop_body
                %v577 = vld [vmem:[%s575] sm:$0xff]
                %578 = vst [vmem:[%s576] sm:$0xff] %v577
                %v579 = vld [vmem:[%s575 + $0x8] sm:$0xff]
                %580 = vst [vmem:[%s576 + $0x8] sm:$0xff] %v579
                %v581 = vld [vmem:[%s575 + $0x10] sm:$0xff]
                %582 = vst [vmem:[%s576 + $0x10] sm:$0xff] %v581
                %v583 = vld [vmem:[%s575 + $0x18] sm:$0xff]
                %584 = vst [vmem:[%s576 + $0x18] sm:$0xff] %v583
                %v585 = vld [vmem:[%s575 + $0x20] sm:$0xff]
                %586 = vst [vmem:[%s576 + $0x20] sm:$0xff] %v585
                %v587 = vld [vmem:[%s575 + $0x28] sm:$0xff]
                %588 = vst [vmem:[%s576 + $0x28] sm:$0xff] %v587
                %v589 = vld [vmem:[%s575 + $0x30] sm:$0xff]
                %590 = vst [vmem:[%s576 + $0x30] sm:$0xff] %v589
                %v591 = vld [vmem:[%s575 + $0x38] sm:$0xff]
                %592 = vst [vmem:[%s576 + $0x38] sm:$0xff] %v591
                %v593 = vld [vmem:[%s575 + $0x40] sm:$0xff]
                %594 = vst [vmem:[%s576 + $0x40] sm:$0xff] %v593
                %v595 = vld [vmem:[%s575 + $0x48] sm:$0xff]
                %596 = vst [vmem:[%s576 + $0x48] sm:$0xff] %v595
                %v597 = vld [vmem:[%s575 + $0x50] sm:$0xff]
                %598 = vst [vmem:[%s576 + $0x50] sm:$0xff] %v597
                %v599 = vld [vmem:[%s575 + $0x58] sm:$0xff]
                %600 = vst [vmem:[%s576 + $0x58] sm:$0xff] %v599
                %v601 = vld [vmem:[%s575 + $0x60] sm:$0xff]
                %602 = vst [vmem:[%s576 + $0x60] sm:$0xff] %v601
                %v603 = vld [vmem:[%s575 + $0x68] sm:$0xff]
                %604 = vst [vmem:[%s576 + $0x68] sm:$0xff] %v603
                %v605 = vld [vmem:[%s575 + $0x70] sm:$0xff]
                %606 = vst [vmem:[%s576 + $0x70] sm:$0xff] %v605
                %v607 = vld [vmem:[%s575 + $0x78] sm:$0xff]
                %608 = vst [vmem:[%s576 + $0x78] sm:$0xff] %v607
                %v609 = vld [vmem:[%s575 + $0x80] sm:$0xff]
                %610 = vst [vmem:[%s576 + $0x80] sm:$0xff] %v609
                %v611 = vld [vmem:[%s575 + $0x88] sm:$0xff]
                %612 = vst [vmem:[%s576 + $0x88] sm:$0xff] %v611
                %v613 = vld [vmem:[%s575 + $0x90] sm:$0xff]
                %614 = vst [vmem:[%s576 + $0x90] sm:$0xff] %v613
                %v615 = vld [vmem:[%s575 + $0x98] sm:$0xff]
                %616 = vst [vmem:[%s576 + $0x98] sm:$0xff] %v615
                %v617 = vld [vmem:[%s575 + $0xa0] sm:$0xff]
                %618 = vst [vmem:[%s576 + $0xa0] sm:$0xff] %v617
                %v619 = vld [vmem:[%s575 + $0xa8] sm:$0xff]
                %620 = vst [vmem:[%s576 + $0xa8] sm:$0xff] %v619
                %v621 = vld [vmem:[%s575 + $0xb0] sm:$0xff]
                %622 = vst [vmem:[%s576 + $0xb0] sm:$0xff] %v621
                %v623 = vld [vmem:[%s575 + $0xb8] sm:$0xff]
                %624 = vst [vmem:[%s576 + $0xb8] sm:$0xff] %v623
                %v625 = vld [vmem:[%s575 + $0xc0] sm:$0xff]
                %626 = vst [vmem:[%s576 + $0xc0] sm:$0xff] %v625
                %v627 = vld [vmem:[%s575 + $0xc8] sm:$0xff]
                %628 = vst [vmem:[%s576 + $0xc8] sm:$0xff] %v627
                %v629 = vld [vmem:[%s575 + $0xd0] sm:$0xff]
                %630 = vst [vmem:[%s576 + $0xd0] sm:$0xff] %v629
                %v631 = vld [vmem:[%s575 + $0xd8] sm:$0xff]
                %632 = vst [vmem:[%s576 + $0xd8] sm:$0xff] %v631
                %v633 = vld [vmem:[%s575 + $0xe0] sm:$0xff]
                %634 = vst [vmem:[%s576 + $0xe0] sm:$0xff] %v633
                %v635 = vld [vmem:[%s575 + $0xe8] sm:$0xff]
                %636 = vst [vmem:[%s576 + $0xe8] sm:$0xff] %v635
                %v637 = vld [vmem:[%s575 + $0xf0] sm:$0xff]
                %638 = vst [vmem:[%s576 + $0xf0] sm:$0xff] %v637
                %v639 = vld [vmem:[%s575 + $0xf8] sm:$0xff]
                %640 = vst [vmem:[%s576 + $0xf8] sm:$0xff] %v639
                %v641 = vld [vmem:[%s575 + $0x100] sm:$0xff]
                %642 = vst [vmem:[%s576 + $0x100] sm:$0xff] %v641
                %v643 = vld [vmem:[%s575 + $0x108] sm:$0xff]
                %644 = vst [vmem:[%s576 + $0x108] sm:$0xff] %v643
                %v645 = vld [vmem:[%s575 + $0x110] sm:$0xff]
                %646 = vst [vmem:[%s576 + $0x110] sm:$0xff] %v645
                %v647 = vld [vmem:[%s575 + $0x118] sm:$0xff]
                %648 = vst [vmem:[%s576 + $0x118] sm:$0xff] %v647
                %v649 = vld [vmem:[%s575 + $0x120] sm:$0xff]
                %650 = vst [vmem:[%s576 + $0x120] sm:$0xff] %v649
                %v651 = vld [vmem:[%s575 + $0x128] sm:$0xff]
                %652 = vst [vmem:[%s576 + $0x128] sm:$0xff] %v651
                %s653 = sadd.s32 1, %s574
                %p654 = scmp.ge.s32.totalorder %s653, %s566
                %s655 = scalar_select %p654, 0, %s653
                %s656 = smul.u32 %s655, 304
                %s657 = smul.u32 %s655, 304
                %s658 = scalar_lea.vmem %s546, %s656 [#allocation3]
                %s659 = scalar_lea.vmem %s557, %s657
              $region53: #{nn_original_gravity_forward.1} parent=47 // loop_footer
                %s571 = sadd.s32 %s569, 1
              $region54: #{nn_original_gravity_forward.1} parent=47 // loop_footer_branch
                %568 = sbr.rel target = $region50
              $region55: #{nn_original_gravity_forward.1} parent=47 // loop_exit
                _
              %s660 = sdiv.u32.pop %s553, 38
              %s661 = srem.u32.pop %s553, 38
              %s662 = smul.u32 %s660, 38
              %s663 = smul.u32 8, %s662
              %s664 = scalar_lea.vmem %s546, %s663 [#allocation3]
              %s665 = smul.u32 8, %s662
              %s666 = scalar_lea.vmem %s557, %s665
              // While loop
              $region56: #{nn_original_gravity_forward.1} parent=47 // loop_pre_header
                _
              $region57: #{nn_original_gravity_forward.1} parent=47 // loop_header
                %s668 = sphi 0, %s670
                %p669 = scmp.ge.s32.totalorder %s668, %s661
                %s673 = sphi 0, %s680
                %s674 = sphi %s664, %s683
                %s675 = sphi %s666, %s684
              $region58: #{nn_original_gravity_forward.1} parent=47 // loop_header_branch
                %672 = sbr.rel (%p669) target = $region62
              $region59: #{nn_original_gravity_forward.1} parent=47 // loop_body
                %v676 = vld [vmem:[%s674] sm:$0xff]
                %677 = vst [vmem:[%s675] sm:$0xff] %v676
                %s678 = sadd.s32 1, %s673
                %p679 = scmp.ge.s32.totalorder %s678, %s661
                %s680 = scalar_select %p679, 0, %s678
                %s681 = smul.u32 %s680, 8
                %s682 = smul.u32 %s680, 8
                %s683 = scalar_lea.vmem %s664, %s681 [#allocation3]
                %s684 = scalar_lea.vmem %s666, %s682
              $region60: #{nn_original_gravity_forward.1} parent=47 // loop_footer
                %s670 = sadd.s32 %s668, 1
              $region61: #{nn_original_gravity_forward.1} parent=47 // loop_footer_branch
                %667 = sbr.rel target = $region57
              $region62: #{nn_original_gravity_forward.1} parent=47 // loop_exit
                _
            $region48: #{nn_original_gravity_forward.1} parent=39 // pred_fallthru
              _
          $region40: #{nn_original_gravity_forward.1} parent=35 // pred_fallthru
            _
          %808 = vnop
        $region36: #{nn_original_gravity_forward.1} parent=31 // pred_fallthru
          _
      $region32: #{nn_original_gravity_forward.1} parent=5 // pred_fallthru
        _
      %p809 = scmp.le.s32.totalorder 2, %s10
      // Predicated region
      $region85: #{nn_original_gravity_forward.1} parent=5 // pred_check
        %p810 = pneg %p809
      $region86: #{nn_original_gravity_forward.1} parent=5 // pred_check_branch
        %812 = sbr.rel (%p810) target = $region88
      $region87: #{nn_original_gravity_forward.1} parent=5 // pred_region
        %s813 = ssub.s32 %s10, 2
        // Predicated region
        $region89: #{nn_original_gravity_forward.1} parent=87 // pred_check
          %p814 = pneg %p107
        $region90: #{nn_original_gravity_forward.1} parent=87 // pred_check_branch
          %816 = sbr.rel (%p814) target = $region92
        $region91: #{nn_original_gravity_forward.1} parent=87 // pred_region
          %s817 = sand.u32 %s92, 1
          %s818 = sand.u32 %s92, 1
          %s819 = smul.addr %s818, 304
          %s820 = scalar_lea.vmem [#allocation3], %s819
        $region92: #{nn_original_gravity_forward.1} parent=87 // pred_fallthru
          _
      $region88: #{nn_original_gravity_forward.1} parent=5 // pred_fallthru
        _
    $region6: #{nn_original_gravity_forward.1} parent=1 // loop_footer
      %s14 = sadd.s32 1, %s10
    $region7: #{nn_original_gravity_forward.1} parent=1 // loop_footer_branch
      %9 = sbr.rel target = $region3
    $region8: #{nn_original_gravity_forward.1} parent=1 // loop_exit
      _

</llo_original>
